<compile_context>
chip_gen: v6e
topology: v6e:2x2x1
jax: 0.10.0
libtpu: 0.0.40
codegen_flags: <defaults>
</compile_context>

<pallas_src>
import functools

import jax
import jax.numpy as jnp
from jax import lax
from jax.experimental import pallas as pl
from jax.experimental.pallas import tpu as pltpu

_LANES = 128
_SUBLANES = 8
_MAX_TILE_ROWS = 8192                   # 8192 x 128 f32 = 4 MiB per input block
_FUSE_BUCKET_BYTES = 12 * 1024 * 1024   # max total input bytes per fused launch
_VMEM_LIMIT_BYTES = 32 * 1024 * 1024    # explicit; safe on v5e/v6e/v7x physical VMEM


# ---------------------------------------------------------------------------
# Fused kernel: every (fake, real) pair of one bucket in a single launch.
# ---------------------------------------------------------------------------
def _fused_fm_kernel(*refs, scales):
    """o[0,0] = sum_k scales[k] * sum(|a_k - b_k|)."""
    o_ref = refs[-1]
    in_refs = refs[:-1]
    acc = jnp.float32(0.0)
    for k, s in enumerate(scales):
        a = in_refs[2 * k][...].astype(jnp.float32)
        b = in_refs[2 * k + 1][...].astype(jnp.float32)
        acc = acc + jnp.float32(s) * jnp.sum(jnp.abs(a - b))
    o_ref[0, 0] = acc


def _fused_fm_sum(pairs):
    """pairs: [(a2d, b2d, scale), ...] -> f32 scalar sum_k scale_k*sum|a_k-b_k|."""
    flat_inputs = []
    scales = []
    for a2d, b2d, s in pairs:
        flat_inputs.extend((a2d, b2d))
        scales.append(float(s))
    n_elems = sum(int(x.size) for x in flat_inputs) // 2
    bytes_accessed = sum(int(x.size) * x.dtype.itemsize for x in flat_inputs) + 4

    kernel = functools.partial(_fused_fm_kernel, scales=tuple(scales))
    out = pl.pallas_call(
        kernel,
        out_shape=jax.ShapeDtypeStruct((1, 1), jnp.float32),
        in_specs=[pl.BlockSpec(memory_space=pltpu.MemorySpace.VMEM)
                  for _ in flat_inputs],
        out_specs=pl.BlockSpec(memory_space=pltpu.SMEM),
        cost_estimate=pl.CostEstimate(
            flops=3 * n_elems + 2 * len(scales),
            transcendentals=0,
            bytes_accessed=bytes_accessed),
        compiler_params=pltpu.CompilerParams(
            vmem_limit_bytes=_VMEM_LIMIT_BYTES),
    )(*flat_inputs)
    return out[0, 0]


# ---------------------------------------------------------------------------
# Blocked streaming kernel for large features (rows > _MAX_TILE_ROWS).
# ---------------------------------------------------------------------------
def _l1_sum_blocked_kernel(a_ref, b_ref, o_ref, acc_ref, *, total_rows,
                           tile_rows, needs_mask):
    i = pl.program_id(0)
    last = pl.num_programs(0) - 1

    @pl.when(i == 0)
    def _():
        acc_ref[...] = jnp.zeros_like(acc_ref)

    a = a_ref[...].astype(jnp.float32)
    b = b_ref[...].astype(jnp.float32)
    absdiff = jnp.abs(a - b)

    def accumulate(x):
        # Collapse onto a single vreg: pure VALU vreg adds, no big acc RMW.
        acc_ref[...] += x.reshape(tile_rows // _SUBLANES, _SUBLANES,
                                  _LANES).sum(axis=0)

    if needs_mask:
        # Only the final block can be ragged; full blocks skip the mask.
        @pl.when(i < last)
        def _():
            accumulate(absdiff)

        @pl.when(i == last)
        def _():
            row = lax.broadcasted_iota(jnp.int32, (tile_rows, _LANES), 0)
            valid = row < (total_rows - i * tile_rows)
            accumulate(jnp.where(valid, absdiff, jnp.float32(0.0)))
    else:
        accumulate(absdiff)

    @pl.when(i == last)
    def _():
        o_ref[0, 0] = jnp.sum(acc_ref[...])   # single 1K-element final reduce


def _l1_sum_blocked(a2d, b2d):
    """sum(|a2d - b2d|) as an f32 scalar for (rows, 128) inputs, rows > tile."""
    rows = a2d.shape[0]
    tile_rows = _MAX_TILE_ROWS
    n_blocks = pl.cdiv(rows, tile_rows)
    needs_mask = (rows % tile_rows) != 0

    kernel = functools.partial(
        _l1_sum_blocked_kernel,
        total_rows=rows, tile_rows=tile_rows, needs_mask=needs_mask)

    out = pl.pallas_call(
        kernel,
        out_shape=jax.ShapeDtypeStruct((1, 1), jnp.float32),
        grid_spec=pltpu.PrefetchScalarGridSpec(
            num_scalar_prefetch=0,
            grid=(n_blocks,),
            in_specs=[
                pl.BlockSpec((tile_rows, _LANES), lambda i: (i, 0)),
                pl.BlockSpec((tile_rows, _LANES), lambda i: (i, 0)),
            ],
            out_specs=pl.BlockSpec(memory_space=pltpu.SMEM),
            scratch_shapes=[pltpu.VMEM((_SUBLANES, _LANES), jnp.float32)],
        ),
        compiler_params=pltpu.CompilerParams(
            dimension_semantics=("arbitrary",),      # reduction axis
            vmem_limit_bytes=_VMEM_LIMIT_BYTES,
        ),
        cost_estimate=pl.CostEstimate(
            flops=3 * rows * _LANES,
            transcendentals=0,
            bytes_accessed=(int(a2d.size) * a2d.dtype.itemsize
                            + int(b2d.size) * b2d.dtype.itemsize + 4)),
    )(a2d, b2d)
    return out[0, 0]


# ---------------------------------------------------------------------------
# Wrappers.
# ---------------------------------------------------------------------------
def _flatten_to_lanes(x):
    """Ravel to (rows, 128) in NATIVE dtype (free when size % 128 == 0)."""
    flat = jnp.ravel(x)
    rem = flat.shape[0] % _LANES
    if rem != 0:
        # Zero pad on BOTH operands -> zero |a-b| contribution.
        flat = jnp.pad(flat, (0, _LANES - rem))
    return flat.reshape(-1, _LANES)


def _adv_loss_value(fake_features, real_features, v_loss):
    n_feat = len(fake_features)
    feat_weight = 10.0 / n_feat

    fusable, blocked = [], []
    for i in range(n_feat - 1):
        a, b = fake_features[i], real_features[i]
        a2d, b2d = _flatten_to_lanes(a), _flatten_to_lanes(b)
        scale = feat_weight / a.size           # fold weight & mean into kernel
        if a2d.shape[0] > _MAX_TILE_ROWS:
            blocked.append((a2d, b2d, scale))
        else:
            fusable.append((a2d, b2d, scale))

    fm_loss = jnp.float32(0.0)

    def _flush(fm, bucket):
        return fm + _fused_fm_sum(bucket) if bucket else fm

    # Greedy-bucket the small pairs so each fused launch stays inside VMEM.
    bucket, bucket_bytes = [], 0
    for a2d, b2d, s in fusable:
        pair_bytes = (int(a2d.size) * a2d.dtype.itemsize
                      + int(b2d.size) * b2d.dtype.itemsize)
        if bucket and bucket_bytes + pair_bytes > _FUSE_BUCKET_BYTES:
            fm_loss = _flush(fm_loss, bucket)
            bucket, bucket_bytes = [], 0
        bucket.append((a2d, b2d, s))
        bucket_bytes += pair_bytes
    fm_loss = _flush(fm_loss, bucket)

    for a2d, b2d, s in blocked:
        fm_loss = fm_loss + jnp.float32(s) * _l1_sum_blocked(a2d, b2d)

    return -jnp.asarray(v_loss, jnp.float32) + fm_loss


@jax.custom_vjp
def adv_loss(fake_features, real_features, v_loss):
    """Pallas implementation of AdvLoss.forward (differentiable)."""
    return _adv_loss_value(fake_features, real_features, v_loss)


def _adv_loss_fwd(fake_features, real_features, v_loss):
    out = _adv_loss_value(fake_features, real_features, v_loss)
    return out, (fake_features, real_features, jnp.asarray(v_loss))


def _match_seq(proto, items):
    return tuple(items) if isinstance(proto, tuple) else list(items)


def _adv_loss_bwd(res, g):
    fake_features, real_features, v_arr = res
    n_feat = len(fake_features)
    feat_weight = 10.0 / n_feat
    g32 = jnp.asarray(g, jnp.float32)

    fake_ct, real_ct = [], []
    for i, (a, b) in enumerate(zip(fake_features, real_features)):
        if i < n_feat - 1:
            coeff = g32 * jnp.float32(feat_weight / a.size)
            diff = a.astype(jnp.float32) - b.astype(jnp.float32)
            fake_ct.append((coeff * jnp.sign(diff)).astype(a.dtype))
        else:
            fake_ct.append(jnp.zeros_like(a))       # last feature unused
        real_ct.append(jnp.zeros_like(b))           # .detach(): no grad
    v_ct = jnp.broadcast_to(-g32, v_arr.shape).astype(v_arr.dtype)
    return (_match_seq(fake_features, fake_ct),
            _match_seq(real_features, real_ct),
            v_ct)


adv_loss.defvjp(_adv_loss_fwd, _adv_loss_bwd)


if __name__ == "__main__":
    key = jax.random.PRNGKey(0)

    def reference(fs, rs, vl):
        n = len(fs)
        out = -jnp.asarray(vl, jnp.float32)
        for i in range(n - 1):
            out = out + (10.0 / n) * jnp.mean(jnp.abs(fs[i] - rs[i]))
        return out

    # --- Test 1: multi-scale discriminator-style feature pyramid (NCHW). ---
    shapes = [(2, 4, 16, 16), (2, 8, 8, 8), (2, 16, 4, 4)]
    keys = jax.random.split(key, 2 * len(shapes) + 1)
    fake_features = [jax.random.normal(keys[i], s, dtype=jnp.float32)
                     for i, s in enumerate(shapes)]
    real_features = [jax.random.normal(keys[len(shapes) + i], s, dtype=jnp.float32)
                     for i, s in enumerate(shapes)]
    v_loss = jax.random.normal(keys[-1], (), dtype=jnp.float32)

    adv_loss_jit = jax.jit(adv_loss)
    out = jax.block_until_ready(adv_loss_jit(fake_features, real_features, v_loss))
    ref = reference(fake_features, real_features, v_loss)
    assert jnp.allclose(out, ref, rtol=1e-5, atol=1e-5), (out, ref)

    # --- Test 2: mixed pyramid exercising the ragged-size (pad) path and the
    # blocked streaming kernel with a masked final block. ---
    shapes2 = [(2, 4, 16, 16), (3, 7, 11, 13), (1, 9000, 128), (2, 16, 4, 4)]
    keys2 = jax.random.split(jax.random.PRNGKey(1), 2 * len(shapes2))
    fake2 = [jax.random.normal(keys2[i], s, dtype=jnp.float32)
             for i, s in enumerate(shapes2)]
    real2 = [jax.random.normal(keys2[len(shapes2) + i], s, dtype=jnp.float32)
             for i, s in enumerate(shapes2)]
    out2 = jax.block_until_ready(jax.jit(adv_loss)(fake2, real2, v_loss))
    ref2 = reference(fake2, real2, v_loss)
    assert jnp.allclose(out2, ref2, rtol=1e-4, atol=1e-4), (out2, ref2)

    # --- Test 3: custom VJP matches autodiff of the pure-JAX reference. ---
    grads = jax.jit(jax.grad(adv_loss, argnums=(0, 2)))(
        fake_features, real_features, v_loss)
    ref_grads = jax.grad(
        lambda fs, vl: reference(fs, real_features, vl), argnums=(0, 1)
    )(fake_features, v_loss)
    for ga, gr in zip(grads[0], ref_grads[0]):
        assert jnp.allclose(ga, gr, rtol=1e-5, atol=1e-6), (ga, gr)
    assert jnp.allclose(grads[1], ref_grads[1], rtol=1e-5, atol=1e-6)

    print("KERNEL_OK")
</pallas_src>

<mosaic_0001>
module attributes {stable_mosaic.version = 11 : i64} {
  func.func @_fused_fm_kernel(%arg0: memref<16x128xf32, #tpu.memory_space<vmem>>, %arg1: memref<16x128xf32, #tpu.memory_space<vmem>>, %arg2: memref<8x128xf32, #tpu.memory_space<vmem>>, %arg3: memref<8x128xf32, #tpu.memory_space<vmem>>, %arg4: memref<1x1xf32, #tpu.memory_space<smem>>) attributes {dimension_semantics = [], scalar_prefetch = 0 : i64, scratch_operands = 0 : i64, tpu.core_type = #tpu.core_type<tc>} {
    %c0 = arith.constant 0 : index
    %c0_0 = arith.constant 0 : index
    %0 = vector.load %arg0[%c0, %c0_0] : memref<16x128xf32, #tpu.memory_space<vmem>>, vector<16x128xf32>
    %c0_1 = arith.constant 0 : index
    %c0_2 = arith.constant 0 : index
    %1 = vector.load %arg1[%c0_1, %c0_2] : memref<16x128xf32, #tpu.memory_space<vmem>>, vector<16x128xf32>
    %2 = arith.subf %0, %1 : vector<16x128xf32>
    %3 = math.absf %2 : vector<16x128xf32>
    %4 = vector.shape_cast %3 : vector<16x128xf32> to vector<1x16x128xf32>
    %cst = arith.constant dense<0.000000e+00> : vector<1xf32>
    %5 = vector.multi_reduction <add>, %4, %cst [1, 2] : vector<1x16x128xf32> to vector<1xf32>
    %6 = vector.shape_cast %5 : vector<1xf32> to vector<1x1x1xf32>
    %7 = vector.extract %6[0, 0, 0] : f32 from vector<1x1x1xf32>
    %cst_3 = arith.constant 0.00162760413 : f32
    %8 = arith.mulf %cst_3, %7 : f32
    %cst_4 = arith.constant 0.000000e+00 : f32
    %9 = arith.addf %cst_4, %8 : f32
    %c0_5 = arith.constant 0 : index
    %c0_6 = arith.constant 0 : index
    %10 = vector.load %arg2[%c0_5, %c0_6] : memref<8x128xf32, #tpu.memory_space<vmem>>, vector<8x128xf32>
    %c0_7 = arith.constant 0 : index
    %c0_8 = arith.constant 0 : index
    %11 = vector.load %arg3[%c0_7, %c0_8] : memref<8x128xf32, #tpu.memory_space<vmem>>, vector<8x128xf32>
    %12 = arith.subf %10, %11 : vector<8x128xf32>
    %13 = math.absf %12 : vector<8x128xf32>
    %14 = vector.shape_cast %13 : vector<8x128xf32> to vector<1x8x128xf32>
    %cst_9 = arith.constant dense<0.000000e+00> : vector<1xf32>
    %15 = vector.multi_reduction <add>, %14, %cst_9 [1, 2] : vector<1x8x128xf32> to vector<1xf32>
    %16 = vector.shape_cast %15 : vector<1xf32> to vector<1x1x1xf32>
    %17 = vector.extract %16[0, 0, 0] : f32 from vector<1x1x1xf32>
    %cst_10 = arith.constant 0.00325520826 : f32
    %18 = arith.mulf %cst_10, %17 : f32
    %19 = arith.addf %9, %18 : f32
    %c0_11 = arith.constant 0 : index
    %c0_12 = arith.constant 0 : index
    %20 = memref.load %arg4[%c0_11, %c0_12] : memref<1x1xf32, #tpu.memory_space<smem>>
    memref.store %19, %arg4[%c0_11, %c0_12] : memref<1x1xf32, #tpu.memory_space<smem>>
    return
  }
}

</mosaic_0001>

<llo_original>
// kernel: adv_loss.1
$region0: #{adv_loss.1}
  #allocation0 [shape = 'u32[]', space=smem, size = 0x4, offset = 0x4, fixed_abs, tag = 'smem constant byte address 0x4 - core index']
  #allocation1 [shape = 'u32[144,128]{1,0:T(1,128)}', space=vmem, size = 0x12000, scoped, tag = 'internal scratch']
  %s0 = inlined_call_operand.vmem [shape: f32[16,128], index: 0, kind: input, shape index: {}]
  %s1 = inlined_call_operand.vmem [shape: f32[16,128], index: 1, kind: input, shape index: {}]
  %s2 = inlined_call_operand.vmem [shape: f32[8,128], index: 2, kind: input, shape index: {}]
  %s3 = inlined_call_operand.vmem [shape: f32[8,128], index: 3, kind: input, shape index: {}]
  %s4 = inlined_call_operand.hbm [shape: f32[1,1], index: 4, kind: output, shape index: {}]
  %s5 = sld [smem:[#allocation0]]
  $region26: #{adv_loss.1} parent=0
    _
  %s7 = ssub.s32 1, %s5
  %s8 = scalar_select 0, %s7, %s5
  $region1: #{adv_loss.1} parent=0
    #allocation2 [shape = 'u8[512]{0}', space=smem, size = 0x200, scoped, tag = 'output window, operand 0, single buffered']
    #allocation3 [shape = 's32[1]{0}', space=sflag, size = 0x4, scoped, tag = 'scoped memory for adv_loss.1']
    %9 = vsyncpa [#allocation3], 0
    // Predicated region
    $region2: #{adv_loss.1} parent=1 // pred_check
      _
    $region3: #{adv_loss.1} parent=1 // pred_check_branch
      %11 = sbr.rel (0) target = $region5
    $region4: #{adv_loss.1} parent=1 // pred_region
      _
    $region5: #{adv_loss.1} parent=1 // pred_fallthru
      _
    // Predicated region
    $region6: #{adv_loss.1} parent=1 // pred_check
      _
    $region7: #{adv_loss.1} parent=1 // pred_check_branch
      %13 = sbr.rel (0) target = $region9
    $region8: #{adv_loss.1} parent=1 // pred_region
      _
    $region9: #{adv_loss.1} parent=1 // pred_fallthru
      _
    // Predicated region
    $region10: #{adv_loss.1} parent=1 // pred_check
      _
    $region11: #{adv_loss.1} parent=1 // pred_check_branch
      %15 = sbr.rel (0) target = $region13
    $region12: #{adv_loss.1} parent=1 // pred_region
      _
    $region13: #{adv_loss.1} parent=1 // pred_fallthru
      _
    // Predicated region
    $region14: #{adv_loss.1} parent=1 // pred_check
      _
    $region15: #{adv_loss.1} parent=1 // pred_check_branch
      %17 = sbr.rel (0) target = $region17
    $region16: #{adv_loss.1} parent=1 // pred_region
      _
    $region17: #{adv_loss.1} parent=1 // pred_fallthru
      _
    %v18 = vld [vmem:[%s0] sm:$0xff]
    %v19 = vld [vmem:[%s0 + $0x8] sm:$0xff]
    %v20 = vld [vmem:[%s1] sm:$0xff]
    %v21 = vld [vmem:[%s1 + $0x8] sm:$0xff]
    %v22 = vsub.f32 %v18, %v20
    %v23 = vsub.f32 %v19, %v21
    %v24 = vand.u32 2147483647, %v22
    %v25 = vand.u32 2147483647, %v23
    %v26 = vadd.f32 %v24, %v25
    %27 = vadd.xlane.f32.xlu0 %v26
    %v28 = vpop.xlane.xlu0 %27
    %v29 = vrot.slane %v28, 4
    %v30 = vadd.f32 %v28, %v29
    %v31 = vrot.slane %v30, 2
    %v32 = vadd.f32 %v30, %v31
    %v33 = vrot.slane %v32, 1
    %v34 = vadd.f32 %v32, %v33
    %s35 = vtos %v34
    %s36 = smul.f32 %s35, 0.0016276041
    %s37 = sadd.f32 %s36, 0.0
    %v38 = vld [vmem:[%s2] sm:$0xff]
    %v39 = vld [vmem:[%s3] sm:$0xff]
    %v40 = vsub.f32 %v38, %v39
    %v41 = vand.u32 2147483647, %v40
    %42 = vadd.xlane.f32.xlu0 %v41
    %v43 = vpop.xlane.xlu0 %42
    %v44 = vrot.slane %v43, 4
    %v45 = vadd.f32 %v43, %v44
    %v46 = vrot.slane %v45, 2
    %v47 = vadd.f32 %v45, %v46
    %v48 = vrot.slane %v47, 1
    %v49 = vadd.f32 %v47, %v48
    %s50 = vtos %v49
    %s51 = smul.f32 %s50, 0.0032552083
    %s52 = sadd.f32 %s37, %s51
    %s53 = scalar_lea.smem [#allocation2], 0
    %54 = sst [smem:[%s53]] %s52
    // Predicated region
    $region18: #{adv_loss.1} parent=1 // pred_check
      _
    $region19: #{adv_loss.1} parent=1 // pred_check_branch
      %56 = sbr.rel (0) target = $region21
    $region20: #{adv_loss.1} parent=1 // pred_region
      %s58 = ssub.s32 16, 16
      %59 = vsyncadd [#allocation3], %s58
      %62 = dma.smem_to_hbm [#allocation2], 16, %s4, [#allocation3]
    $region21: #{adv_loss.1} parent=1 // pred_fallthru
      _
    // Predicated region
    $region22: #{adv_loss.1} parent=1 // pred_check
      _
    $region23: #{adv_loss.1} parent=1 // pred_check_branch
      %64 = sbr.rel (0) target = $region25
    $region24: #{adv_loss.1} parent=1 // pred_region
      %65 = dma.done [#allocation3], 16
    $region25: #{adv_loss.1} parent=1 // pred_fallthru
      _
    %66 = sfence
    %67 = vsyncpa [#allocation3], 1

</llo_original>
